<compile_context>
chip_gen: v7x
topology: tpu7x:2x2x1
jax: 0.10.0
libtpu: 0.0.40
codegen_flags: <defaults>
</compile_context>

<pallas_src>
import functools
import math

import jax
import jax.numpy as jnp
from jax.experimental import pallas as pl
from jax.experimental.pallas import tpu as pltpu


# ------------------------------- kernels -------------------------------------

def _pos_enc_kernel_3d(x_ref, pe_ref, o_ref):
    # x_ref/o_ref: (bs, B, D); pe_ref: (bs, 1, D) -> stride-0 broadcast over the
    # batch (sublane) axis, VPU add is the only per-element work.
    o_ref[...] = (x_ref[...] + pe_ref[...]).astype(o_ref.dtype)


def _pos_enc_kernel_2d(x_ref, pe_ref, o_ref, *, batch):
    # x_ref/o_ref: (bs, B*D) lane-dense slab; pe_ref: (bs, D).
    # jnp.tile along lanes matches the (b, d) interleaving of the flattened axis.
    o_ref[...] = (x_ref[...] + jnp.tile(pe_ref[...], (1, batch))).astype(o_ref.dtype)


# ----------------------------- buffer (init) ----------------------------------

def make_positional_encoding_buffer(d_model, max_len=5000):
    """Matches PositionalEncoding.__init__'s registered `pe` buffer, as (max_len, d_model)."""
    position = jnp.arange(max_len, dtype=jnp.float32)[:, None]           # (max_len, 1)
    div_term = jnp.exp(jnp.arange(0, d_model, 2, dtype=jnp.float32)
                       * (-math.log(10000.0) / d_model))                 # (ceil(D/2),)
    angles = position * div_term                                         # (max_len, ceil(D/2))
    pe = jnp.zeros((max_len, d_model), jnp.float32)
    pe = pe.at[:, 0::2].set(jnp.sin(angles))
    pe = pe.at[:, 1::2].set(jnp.cos(angles)[:, : d_model // 2])
    return pe


# ----------------------------- tiling helpers ---------------------------------

def _physical_vmem_bytes():
    """Per-TensorCore VMEM; falls back to the smallest modern value (v7x, 64 MiB)."""
    try:
        info = pltpu.get_tpu_info()
        cap = getattr(info, "vmem_capacity_bytes", None)
        if cap:
            return int(cap)
    except Exception:
        pass
    return 64 << 20


def _choose_block_s(S, B, D, itemsize, budget_bytes, min_grid_steps=4):
    """Largest sequence tile whose double-buffered pipeline fits `budget_bytes`.

    Resident bytes per sequence row:
      2 (double buffer) x [x-in block + out block]  +  2 x pe block
      = 4*B*D*itemsize + 2*D*itemsize
    """
    per_row = itemsize * D * (4 * B + 2)
    bs = budget_bytes // max(per_row, 1)
    # Keep >= min_grid_steps grid steps so the "parallel" axis can be split across
    # v7x's two TensorCores (only when S is big enough for that to matter).
    if S >= 8 * min_grid_steps:
        bs = min(bs, -(-S // min_grid_steps))
    if bs >= S:
        return S
    return max(8, (bs // 8) * 8)  # sublane-aligned when not taking the full dim


# ----------------------------- pallas wrapper ----------------------------------

def positional_encoding_forward(x, pe, *, vmem_limit_bytes=None, donate_x=False):
    """x: (S, B, D); pe: (max_len, D).  Returns x + pe[:S] (dropout == eval identity)."""
    S, B, D = x.shape
    max_len = pe.shape[0]
    assert S <= max_len, f"sequence length {S} exceeds max_len {max_len}"

    pe = pe.astype(x.dtype)                       # halves pe stream / write for bf16
    itemsize = jnp.dtype(x.dtype).itemsize

    phys = _physical_vmem_bytes()
    if vmem_limit_bytes is None:
        # ~48 MiB on v7x (64 MiB physical), ~96 MiB on v5e/v6e (128 MiB physical).
        vmem_limit_bytes = min(phys * 3 // 4, 112 << 20)
    budget = vmem_limit_bytes * 3 // 4            # headroom for Mosaic internals
    bs = _choose_block_s(S, B, D, itemsize, budget)

    cparams = pltpu.CompilerParams(
        dimension_semantics=("parallel",),        # lets v7x split tiles across its 2 TCs
        vmem_limit_bytes=int(vmem_limit_bytes),
    )
    io_aliases = {0: 0} if donate_x else {}
    grid = (pl.cdiv(S, bs),)

    if (D % 128 == 0) and (B >= 8):
        # Lane/sublane-dense 3-D path: D on lanes, B on sublanes; pe is a
        # (bs, 1, D) block -> stride-0 sublane broadcast inside the kernel.
        pe3 = pe.reshape(max_len, 1, D)
        return pl.pallas_call(
            _pos_enc_kernel_3d,
            out_shape=jax.ShapeDtypeStruct((S, B, D), x.dtype),
            grid=grid,
            in_specs=[
                pl.BlockSpec((bs, B, D), lambda i: (i, 0, 0)),
                pl.BlockSpec((bs, 1, D), lambda i: (i, 0, 0)),
            ],
            out_specs=pl.BlockSpec((bs, B, D), lambda i: (i, 0, 0)),
            compiler_params=cparams,
            input_output_aliases=io_aliases,
        )(x, pe3)

    # Fallback: D not a multiple of 128 or B < 8 -> flatten (B, D) into one dense
    # lane axis so stores are unmasked and no sublanes are wasted.
    x2 = x.reshape(S, B * D)                      # free, contiguous reshape
    out2 = pl.pallas_call(
        functools.partial(_pos_enc_kernel_2d, batch=B),
        out_shape=jax.ShapeDtypeStruct((S, B * D), x.dtype),
        grid=grid,
        in_specs=[
            pl.BlockSpec((bs, B * D), lambda i: (i, 0)),
            pl.BlockSpec((bs, D), lambda i: (i, 0)),
        ],
        out_specs=pl.BlockSpec((bs, B * D), lambda i: (i, 0)),
        compiler_params=cparams,
        input_output_aliases=io_aliases,
    )(x2, pe)
    return out2.reshape(S, B, D)


# TODO(synk): nn.Dropout(p=0.1) is omitted -> equivalent to model.eval(); a training
# path would need an in-kernel PRNG mask (pltpu.prng_*) and a 1/(1-p) scale.

if __name__ == "__main__":
    key = jax.random.PRNGKey(0)

    # Case 1: small, non-lane-dense shapes (exercises the flattened 2-D path).
    S, B, D = 8, 2, 32
    x = jax.random.normal(key, (S, B, D), dtype=jnp.float32)
    pe = make_positional_encoding_buffer(D, max_len=5000)
    out = jax.block_until_ready(positional_encoding_forward(x, pe))
    ref = x + pe[:S][:, None, :]
    assert out.shape == (S, B, D)
    assert bool(jnp.all(jnp.isfinite(out)))
    assert bool(jnp.allclose(out, ref, atol=1e-6, rtol=1e-6))

    # Case 2: lane/sublane-dense shapes (exercises the 3-D stride-0-broadcast path).
    S2, B2, D2 = 16, 8, 128
    x2 = jax.random.normal(jax.random.PRNGKey(1), (S2, B2, D2), dtype=jnp.float32)
    pe2 = make_positional_encoding_buffer(D2, max_len=64)
    out2 = jax.block_until_ready(positional_encoding_forward(x2, pe2))
    ref2 = x2 + pe2[:S2][:, None, :]
    assert out2.shape == (S2, B2, D2)
    assert bool(jnp.allclose(out2, ref2, atol=1e-6, rtol=1e-6))

    print("KERNEL_OK")
</pallas_src>

<mosaic_0001>
module attributes {stable_mosaic.version = 11 : i64} {
  func.func @_pos_enc_kernel_2d(%arg0: i32, %arg1: memref<8x64xf32, #tpu.memory_space<vmem>>, %arg2: memref<8x32xf32, #tpu.memory_space<vmem>>, %arg3: memref<8x64xf32, #tpu.memory_space<vmem>>) attributes {dimension_semantics = [#tpu.dimension_semantics<parallel>], iteration_bounds = array<i64: 1>, scalar_prefetch = 0 : i64, scratch_operands = 0 : i64, tpu.core_type = #tpu.core_type<tc>, window_params = [{transform_indices = @transform_0, window_bounds = array<i64: 8, 64>}, {transform_indices = @transform_1, window_bounds = array<i64: 8, 32>}, {transform_indices = @transform_2, window_bounds = array<i64: 8, 64>}]} {
    %c0 = arith.constant 0 : index
    %c0_0 = arith.constant 0 : index
    %0 = vector.load %arg1[%c0, %c0_0] : memref<8x64xf32, #tpu.memory_space<vmem>>, vector<8x64xf32>
    %c0_1 = arith.constant 0 : index
    %c0_2 = arith.constant 0 : index
    %1 = vector.load %arg2[%c0_1, %c0_2] : memref<8x32xf32, #tpu.memory_space<vmem>>, vector<8x32xf32>
    %2 = tpu.concatenate %1, %1 in 1 : vector<8x32xf32>, vector<8x32xf32> -> vector<8x64xf32>
    %3 = arith.addf %0, %2 : vector<8x64xf32>
    %c0_3 = arith.constant 0 : index
    %c0_4 = arith.constant 0 : index
    %4 = vector.load %arg3[%c0_3, %c0_4] : memref<8x64xf32, #tpu.memory_space<vmem>>, vector<8x64xf32>
    tpu.vector_store %arg3[%c0_3, %c0_4], %3 {strides = array<i32>} : memref<8x64xf32, #tpu.memory_space<vmem>>, vector<8x64xf32>,
    return
  }
  func.func @transform_0(%arg0: i32) -> (i32, i32) {
    %c0_i32 = arith.constant 0 : i32
    %c0_i32_0 = arith.constant 0 : i32
    return %arg0, %c0_i32 : i32, i32
  }
  func.func @transform_1(%arg0: i32) -> (i32, i32) {
    %c0_i32 = arith.constant 0 : i32
    %c0_i32_0 = arith.constant 0 : i32
    return %arg0, %c0_i32 : i32, i32
  }
  func.func @transform_2(%arg0: i32) -> (i32, i32) {
    %c0_i32 = arith.constant 0 : i32
    %c0_i32_0 = arith.constant 0 : i32
    return %arg0, %c0_i32 : i32, i32
  }
}

</mosaic_0001>

<llo_original>
// kernel: tpu_custom_call.1
$region0: #{tpu_custom_call.1}
  #allocation0 [shape = 'u32[]', space=smem, size = 0x4, offset = 0x4, fixed_abs, tag = 'smem constant byte address 0x4 - core index']
  #allocation1 [shape = 'u32[144,128]{1,0:T(1,128)}', space=vmem, size = 0x12000, scoped, tag = 'internal scratch']
  %s0 = inlined_call_operand.vmem [shape: f32[8,64], index: 0, kind: input, shape index: {}]
  %s1 = inlined_call_operand.vmem [shape: f32[5000,32], index: 1, kind: input, shape index: {}]
  %s2 = inlined_call_operand.hbm [shape: f32[8,64], index: 2, kind: output, shape index: {}]
  %s3 = sld [smem:[#allocation0]]
  $region18: #{tpu_custom_call.1} parent=0
    _
  %s5 = ssub.s32 1, %s3
  %s6 = scalar_select 0, %s5, %s3
  $region1: #{tpu_custom_call.1} parent=0
    #allocation2 [shape = 'u8[4096]{0}', space=vmem, size = 0x1000, scoped, tag = 'output window, operand 0, single buffered']
    #allocation3 [shape = 's32[1]{0}', space=sflag, size = 0x4, scoped, tag = 'scoped memory for tpu_custom_call.1']
    %7 = vsyncpa [#allocation3], 0
    // Predicated region
    $region2: #{tpu_custom_call.1} parent=1 // pred_check
      _
    $region3: #{tpu_custom_call.1} parent=1 // pred_check_branch
      %9 = sbr.rel (0) target = $region5
    $region4: #{tpu_custom_call.1} parent=1 // pred_region
      _
    $region5: #{tpu_custom_call.1} parent=1 // pred_fallthru
      _
    // Predicated region
    $region6: #{tpu_custom_call.1} parent=1 // pred_check
      _
    $region7: #{tpu_custom_call.1} parent=1 // pred_check_branch
      %11 = sbr.rel (0) target = $region9
    $region8: #{tpu_custom_call.1} parent=1 // pred_region
      _
    $region9: #{tpu_custom_call.1} parent=1 // pred_fallthru
      _
    %v12 = vld [vmem:[%s0] sm:$0xff]
    %v13 = vld [vmem:[%s1] sm:$0xff]
    %15 = vrot.lane.b32.xlu0 %v13, 32
    %v16 = vpop.permute.xlu0 %15
    %vm18 = vcmask 261120
    %v19 = vsel %vm18, %v13, %v16
    %v20 = vadd.f32 %v12, %v19
    %vm21 = vcmask 523264
    %22 = vst.msk [vmem:[#allocation2] sm:$0xff] %vm21, %v20
    // Predicated region
    $region10: #{tpu_custom_call.1} parent=1 // pred_check
      _
    $region11: #{tpu_custom_call.1} parent=1 // pred_check_branch
      %24 = sbr.rel (0) target = $region13
    $region12: #{tpu_custom_call.1} parent=1 // pred_region
      %s26 = ssub.s32 128, 128
      %27 = vsyncadd [#allocation3], %s26
      %s29 = sshll.u32 [#allocation2], 4
      %s30 = int_to_ptr.vmem [resolvable:$true] %s29
      %32 = dma.vmem_to_hbm [thread:$0]  %s30, 128, %s2, [#allocation3]
    $region13: #{tpu_custom_call.1} parent=1 // pred_fallthru
      _
    // Predicated region
    $region14: #{tpu_custom_call.1} parent=1 // pred_check
      _
    $region15: #{tpu_custom_call.1} parent=1 // pred_check_branch
      %34 = sbr.rel (0) target = $region17
    $region16: #{tpu_custom_call.1} parent=1 // pred_region
      %35 = dma.done [#allocation3], 128
    $region17: #{tpu_custom_call.1} parent=1 // pred_fallthru
      _
    %36 = vsyncpa [#allocation3], 1

</llo_original>
